<compile_context>
chip_gen: v6e
topology: v6e:2x2x1
jax: 0.10.0
libtpu: 0.0.40
codegen_flags: <defaults>
</compile_context>

<pallas_src>
import jax
import jax.numpy as jnp
from jax.experimental import pallas as pl
from jax.experimental.pallas import tpu as pltpu


def _mlp_norm_kernel(x_ref, w0_ref, b0_ref, w1_ref, b1_ref,
                     w2_ref, b2_ref, w3_ref, b3_ref, o_ref):
    # Hoist bias reads (cheap hygiene; avoids repeated broadcast_in_dim if the layer
    # stack is ever wrapped in a loop).
    b0 = b0_ref[...]
    b1 = b1_ref[...]
    b2 = b2_ref[...]
    b3 = b3_ref[...]

    # MXU matmuls with f32 accumulation; operands may be f32 or bf16.
    h = jnp.dot(x_ref[...], w0_ref[...], preferred_element_type=jnp.float32) + b0
    h = jnp.maximum(h, 0.0)
    h = jnp.dot(h.astype(w1_ref.dtype), w1_ref[...],
                preferred_element_type=jnp.float32) + b1
    h = jnp.maximum(h, 0.0)
    h = jnp.dot(h.astype(w2_ref.dtype), w2_ref[...],
                preferred_element_type=jnp.float32) + b2
    h = jnp.maximum(h, 0.0)
    raw = jnp.dot(h.astype(w3_ref.dtype), w3_ref[...],
                  preferred_element_type=jnp.float32) + b3

    # torch: raw / (||raw||_2(dim=-1) + 1e-8). sqrt+sum on VPU/XLU, reciprocal on the
    # otherwise-idle EUP slot (approx=True -> vrcp), so the epilogue is nearly free.
    norm = jnp.sqrt(jnp.sum(raw * raw, axis=-1, keepdims=True))
    inv = pl.reciprocal(norm + 1e-8, approx=True)
    o_ref[...] = (raw * inv).astype(o_ref.dtype)


def _round_up(n, m):
    return ((n + m - 1) // m) * m


def circle_vector_forward(x, params, *, batch_tile=512, use_bf16_inputs=False):
    """x: (B, state_dim). params: 4 x (w:(in,out), b:(out,)). Returns (B, output_dim)."""
    (w0, b0), (w1, b1), (w2, b2), (w3, b3) = params
    B, D = x.shape
    H = w0.shape[1]
    O = w3.shape[1]
    out_dtype = x.dtype

    # Tile choice: run the whole batch in one grid step when it fits under batch_tile,
    # otherwise batch_tile rows per step. Keep batch_tile a multiple of 256 on v6e/v7x
    # so the MXU M-dimension stays full; a grid of length >= 2 lets v7x's two
    # TensorCores both get work via the "parallel" dimension semantics.
    if B <= batch_tile:
        tile = _round_up(B, 8)           # sublane-aligned single step
    else:
        tile = batch_tile
    B_pad = _round_up(B, tile)
    if B_pad != B:
        x = jnp.pad(x, ((0, B_pad - B), (0, 0)))

    if use_bf16_inputs:
        # bf16 operands into the MXU (v6e/v7x fast path); accumulation stays f32 inside
        # the kernel, biases/ReLU/normalize stay f32.
        x = x.astype(jnp.bfloat16)
        w0, w1, w2, w3 = (w.astype(jnp.bfloat16) for w in (w0, w1, w2, w3))

    # Biases as (1, H) rows so they broadcast cleanly across the batch tile.
    b0r, b1r, b2r, b3r = (b.astype(jnp.float32).reshape(1, -1)
                          for b in (b0, b1, b2, b3))

    full = lambda shape: pl.BlockSpec(shape, lambda i: (0, 0))  # grid-invariant operand

    out = pl.pallas_call(
        _mlp_norm_kernel,
        out_shape=jax.ShapeDtypeStruct((B_pad, O), out_dtype),
        grid_spec=pltpu.PrefetchScalarGridSpec(
            num_scalar_prefetch=0,
            grid=(B_pad // tile,),
            in_specs=[
                pl.BlockSpec((tile, D), lambda i: (i, 0)),   # x batch tile
                full((D, H)), full((1, H)),                  # layer 0
                full((H, H)), full((1, H)),                  # layer 1
                full((H, H)), full((1, H)),                  # layer 2
                full((H, O)), full((1, O)),                  # output layer
            ],
            out_specs=pl.BlockSpec((tile, O), lambda i: (i, 0)),
        ),
        compiler_params=pltpu.CompilerParams(
            dimension_semantics=("parallel",)),
    )(x, w0, b0r, w1, b1r, w2, b2r, w3, b3r)

    return out[:B]


def init_params(key, state_dim, hidden, output_dim):
    """Deterministic synthetic init (uniform, Kaiming-like scale, matches nn.Linear default)."""
    sizes = [(state_dim, hidden), (hidden, hidden), (hidden, hidden), (hidden, output_dim)]
    params = []
    for fin, fout in sizes:
        kw, kb, key = jax.random.split(key, 3)
        bound = 1.0 / jnp.sqrt(fin)
        w = jax.random.uniform(kw, (fin, fout), jnp.float32, -bound, bound)
        b = jax.random.uniform(kb, (fout,), jnp.float32, -bound, bound)
        params.append((w, b))
    return params


def reference_forward(x, params):
    (w0, b0), (w1, b1), (w2, b2), (w3, b3) = params
    h = jnp.maximum(x @ w0 + b0, 0.0)
    h = jnp.maximum(h @ w1 + b1, 0.0)
    h = jnp.maximum(h @ w2 + b2, 0.0)
    raw = h @ w3 + b3
    norm = jnp.linalg.norm(raw, axis=-1, keepdims=True)
    return raw / (norm + 1e-8)


if __name__ == "__main__":
    key = jax.random.PRNGKey(0)
    state_dim, hidden, output_dim = 32, 128, 4

    kx, kx2, kp = jax.random.split(key, 3)
    params = init_params(kp, state_dim, hidden, output_dim)

    # Small demo batch: whole batch in a single grid step (no pipeline overhead).
    x_small = jax.random.normal(kx, (16, state_dim), jnp.float32)
    out_small = jax.block_until_ready(circle_vector_forward(x_small, params))
    ref_small = reference_forward(x_small, params)
    assert out_small.shape == (16, output_dim)
    # Tolerance accounts for the EUP approximate-reciprocal normalize.
    assert jnp.allclose(out_small, ref_small, atol=5e-3, rtol=5e-3), "f32 mismatch (small batch)"

    # Non-multiple batch: exercises batch padding + a multi-step grid
    # (grid=2 so both v7x TensorCores get work).
    x_big = jax.random.normal(kx2, (300, state_dim), jnp.float32)
    out_big = jax.block_until_ready(
        circle_vector_forward(x_big, params, batch_tile=256))
    ref_big = reference_forward(x_big, params)
    assert out_big.shape == (300, output_dim)
    assert jnp.allclose(out_big, ref_big, atol=5e-3, rtol=5e-3), "f32 mismatch (tiled batch)"

    # Optional bf16 MXU fast path (f32 accumulation); loose check since bf16 operands
    # quantize the matmul inputs.
    out_bf16 = jax.block_until_ready(
        circle_vector_forward(x_small, params, use_bf16_inputs=True))
    assert out_bf16.shape == (16, output_dim)
    assert bool(jnp.all(jnp.isfinite(out_bf16)))
    assert float(jnp.max(jnp.abs(out_bf16 - ref_small))) < 0.1, "bf16 path grossly off"

    print("KERNEL_OK")
</pallas_src>

<mosaic_0001>
module attributes {stable_mosaic.version = 11 : i64} {
  func.func @_mlp_norm_kernel(%arg0: i32, %arg1: memref<16x32xf32, #tpu.memory_space<vmem>>, %arg2: memref<32x128xf32, #tpu.memory_space<vmem>>, %arg3: memref<1x128xf32, #tpu.memory_space<vmem>>, %arg4: memref<128x128xf32, #tpu.memory_space<vmem>>, %arg5: memref<1x128xf32, #tpu.memory_space<vmem>>, %arg6: memref<128x128xf32, #tpu.memory_space<vmem>>, %arg7: memref<1x128xf32, #tpu.memory_space<vmem>>, %arg8: memref<128x4xf32, #tpu.memory_space<vmem>>, %arg9: memref<1x4xf32, #tpu.memory_space<vmem>>, %arg10: memref<16x4xf32, #tpu.memory_space<vmem>>) attributes {dimension_semantics = [#tpu.dimension_semantics<parallel>], iteration_bounds = array<i64: 1>, scalar_prefetch = 0 : i64, scratch_operands = 0 : i64, tpu.core_type = #tpu.core_type<tc>, window_params = [{transform_indices = @transform_0, window_bounds = array<i64: 16, 32>}, {pipeline_mode = #tpu.pipeline_mode<synchronous>, transform_indices = @transform_1, window_bounds = array<i64: 32, 128>}, {pipeline_mode = #tpu.pipeline_mode<synchronous>, transform_indices = @transform_2, window_bounds = array<i64: 1, 128>}, {pipeline_mode = #tpu.pipeline_mode<synchronous>, transform_indices = @transform_3, window_bounds = array<i64: 128, 128>}, {pipeline_mode = #tpu.pipeline_mode<synchronous>, transform_indices = @transform_4, window_bounds = array<i64: 1, 128>}, {pipeline_mode = #tpu.pipeline_mode<synchronous>, transform_indices = @transform_5, window_bounds = array<i64: 128, 128>}, {pipeline_mode = #tpu.pipeline_mode<synchronous>, transform_indices = @transform_6, window_bounds = array<i64: 1, 128>}, {pipeline_mode = #tpu.pipeline_mode<synchronous>, transform_indices = @transform_7, window_bounds = array<i64: 128, 4>}, {pipeline_mode = #tpu.pipeline_mode<synchronous>, transform_indices = @transform_8, window_bounds = array<i64: 1, 4>}, {transform_indices = @transform_9, window_bounds = array<i64: 16, 4>}]} {
    %c0 = arith.constant 0 : index
    %c0_0 = arith.constant 0 : index
    %0 = vector.load %arg3[%c0, %c0_0] : memref<1x128xf32, #tpu.memory_space<vmem>>, vector<1x128xf32>
    %c0_1 = arith.constant 0 : index
    %c0_2 = arith.constant 0 : index
    %1 = vector.load %arg5[%c0_1, %c0_2] : memref<1x128xf32, #tpu.memory_space<vmem>>, vector<1x128xf32>
    %c0_3 = arith.constant 0 : index
    %c0_4 = arith.constant 0 : index
    %2 = vector.load %arg7[%c0_3, %c0_4] : memref<1x128xf32, #tpu.memory_space<vmem>>, vector<1x128xf32>
    %c0_5 = arith.constant 0 : index
    %c0_6 = arith.constant 0 : index
    %3 = vector.load %arg9[%c0_5, %c0_6] : memref<1x4xf32, #tpu.memory_space<vmem>>, vector<1x4xf32>
    %c0_7 = arith.constant 0 : index
    %c0_8 = arith.constant 0 : index
    %4 = vector.load %arg1[%c0_7, %c0_8] : memref<16x32xf32, #tpu.memory_space<vmem>>, vector<16x32xf32>
    %c0_9 = arith.constant 0 : index
    %c0_10 = arith.constant 0 : index
    %5 = vector.load %arg2[%c0_9, %c0_10] : memref<32x128xf32, #tpu.memory_space<vmem>>, vector<32x128xf32>
    %cst = arith.constant dense<0.000000e+00> : vector<16x128xf32>
    %6 = tpu.matmul %4, %5, %cst {dimension_numbers = #tpu.dot_dimension_numbers<[1], [0], [0], [1], [0, 0, 1, 1], [], []>} : vector<16x32xf32>, vector<32x128xf32>, vector<16x128xf32> -> vector<16x128xf32>
    %7 = vector.broadcast %0 : vector<1x128xf32> to vector<16x128xf32>
    %8 = arith.addf %6, %7 : vector<16x128xf32>
    %cst_11 = arith.constant 0.000000e+00 : f32
    %9 = vector.broadcast %cst_11 : f32 to vector<16x128xf32>
    %10 = arith.maximumf %8, %9 : vector<16x128xf32>
    %c0_12 = arith.constant 0 : index
    %c0_13 = arith.constant 0 : index
    %11 = vector.load %arg4[%c0_12, %c0_13] : memref<128x128xf32, #tpu.memory_space<vmem>>, vector<128x128xf32>
    %cst_14 = arith.constant dense<0.000000e+00> : vector<16x128xf32>
    %12 = tpu.matmul %10, %11, %cst_14 {dimension_numbers = #tpu.dot_dimension_numbers<[1], [0], [0], [1], [0, 0, 1, 1], [], []>} : vector<16x128xf32>, vector<128x128xf32>, vector<16x128xf32> -> vector<16x128xf32>
    %13 = vector.broadcast %1 : vector<1x128xf32> to vector<16x128xf32>
    %14 = arith.addf %12, %13 : vector<16x128xf32>
    %cst_15 = arith.constant 0.000000e+00 : f32
    %15 = vector.broadcast %cst_15 : f32 to vector<16x128xf32>
    %16 = arith.maximumf %14, %15 : vector<16x128xf32>
    %c0_16 = arith.constant 0 : index
    %c0_17 = arith.constant 0 : index
    %17 = vector.load %arg6[%c0_16, %c0_17] : memref<128x128xf32, #tpu.memory_space<vmem>>, vector<128x128xf32>
    %cst_18 = arith.constant dense<0.000000e+00> : vector<16x128xf32>
    %18 = tpu.matmul %16, %17, %cst_18 {dimension_numbers = #tpu.dot_dimension_numbers<[1], [0], [0], [1], [0, 0, 1, 1], [], []>} : vector<16x128xf32>, vector<128x128xf32>, vector<16x128xf32> -> vector<16x128xf32>
    %19 = vector.broadcast %2 : vector<1x128xf32> to vector<16x128xf32>
    %20 = arith.addf %18, %19 : vector<16x128xf32>
    %cst_19 = arith.constant 0.000000e+00 : f32
    %21 = vector.broadcast %cst_19 : f32 to vector<16x128xf32>
    %22 = arith.maximumf %20, %21 : vector<16x128xf32>
    %c0_20 = arith.constant 0 : index
    %c0_21 = arith.constant 0 : index
    %23 = vector.load %arg8[%c0_20, %c0_21] : memref<128x4xf32, #tpu.memory_space<vmem>>, vector<128x4xf32>
    %cst_22 = arith.constant dense<0.000000e+00> : vector<16x4xf32>
    %24 = tpu.matmul %22, %23, %cst_22 {dimension_numbers = #tpu.dot_dimension_numbers<[1], [0], [0], [1], [0, 0, 1, 1], [], []>} : vector<16x128xf32>, vector<128x4xf32>, vector<16x4xf32> -> vector<16x4xf32>
    %25 = vector.broadcast %3 : vector<1x4xf32> to vector<16x4xf32>
    %26 = arith.addf %24, %25 : vector<16x4xf32>
    %27 = arith.mulf %26, %26 : vector<16x4xf32>
    %cst_23 = arith.constant dense<0.000000e+00> : vector<16xf32>
    %28 = vector.multi_reduction <add>, %27, %cst_23 [1] : vector<16x4xf32> to vector<16xf32>
    %29 = vector.shape_cast %28 : vector<16xf32> to vector<16x1xf32>
    %30 = math.sqrt %29 : vector<16x1xf32>
    %cst_24 = arith.constant 9.99999993E-9 : f32
    %31 = vector.broadcast %cst_24 : f32 to vector<16x1xf32>
    %32 = arith.addf %30, %31 : vector<16x1xf32>
    %33 = tpu.reciprocal %32 {approx = true} : vector<16x1xf32> -> vector<16x1xf32>
    %34 = vector.broadcast %33 : vector<16x1xf32> to vector<16x4xf32>
    %35 = arith.mulf %26, %34 : vector<16x4xf32>
    %c0_25 = arith.constant 0 : index
    %c0_26 = arith.constant 0 : index
    %36 = vector.load %arg10[%c0_25, %c0_26] : memref<16x4xf32, #tpu.memory_space<vmem>>, vector<16x4xf32>
    tpu.vector_store %arg10[%c0_25, %c0_26], %35 {strides = array<i32>} : memref<16x4xf32, #tpu.memory_space<vmem>>, vector<16x4xf32>,
    return
  }
  func.func @transform_0(%arg0: i32) -> (i32, i32) {
    %c0_i32 = arith.constant 0 : i32
    %c0_i32_0 = arith.constant 0 : i32
    return %arg0, %c0_i32 : i32, i32
  }
  func.func @transform_1(%arg0: i32) -> (i32, i32) {
    %c0_i32 = arith.constant 0 : i32
    %c0_i32_0 = arith.constant 0 : i32
    %c0_i32_1 = arith.constant 0 : i32
    return %c0_i32, %c0_i32_0 : i32, i32
  }
  func.func @transform_2(%arg0: i32) -> (i32, i32) {
    %c0_i32 = arith.constant 0 : i32
    %c0_i32_0 = arith.constant 0 : i32
    %c0_i32_1 = arith.constant 0 : i32
    return %c0_i32, %c0_i32_0 : i32, i32
  }
  func.func @transform_3(%arg0: i32) -> (i32, i32) {
    %c0_i32 = arith.constant 0 : i32
    %c0_i32_0 = arith.constant 0 : i32
    %c0_i32_1 = arith.constant 0 : i32
    return %c0_i32, %c0_i32_0 : i32, i32
  }
  func.func @transform_4(%arg0: i32) -> (i32, i32) {
    %c0_i32 = arith.constant 0 : i32
    %c0_i32_0 = arith.constant 0 : i32
    %c0_i32_1 = arith.constant 0 : i32
    return %c0_i32, %c0_i32_0 : i32, i32
  }
  func.func @transform_5(%arg0: i32) -> (i32, i32) {
    %c0_i32 = arith.constant 0 : i32
    %c0_i32_0 = arith.constant 0 : i32
    %c0_i32_1 = arith.constant 0 : i32
    return %c0_i32, %c0_i32_0 : i32, i32
  }
  func.func @transform_6(%arg0: i32) -> (i32, i32) {
    %c0_i32 = arith.constant 0 : i32
    %c0_i32_0 = arith.constant 0 : i32
    %c0_i32_1 = arith.constant 0 : i32
    return %c0_i32, %c0_i32_0 : i32, i32
  }
  func.func @transform_7(%arg0: i32) -> (i32, i32) {
    %c0_i32 = arith.constant 0 : i32
    %c0_i32_0 = arith.constant 0 : i32
    %c0_i32_1 = arith.constant 0 : i32
    return %c0_i32, %c0_i32_0 : i32, i32
  }
  func.func @transform_8(%arg0: i32) -> (i32, i32) {
    %c0_i32 = arith.constant 0 : i32
    %c0_i32_0 = arith.constant 0 : i32
    %c0_i32_1 = arith.constant 0 : i32
    return %c0_i32, %c0_i32_0 : i32, i32
  }
  func.func @transform_9(%arg0: i32) -> (i32, i32) {
    %c0_i32 = arith.constant 0 : i32
    %c0_i32_0 = arith.constant 0 : i32
    return %arg0, %c0_i32 : i32, i32
  }
}

</mosaic_0001>

<llo_original>
// kernel: tpu_custom_call.1
$region0: #{tpu_custom_call.1}
  #allocation0 [shape = 'u32[]', space=smem, size = 0x4, offset = 0x4, fixed_abs, tag = 'smem constant byte address 0x4 - core index']
  #allocation1 [shape = 'u32[144,128]{1,0:T(1,128)}', space=vmem, size = 0x12000, scoped, tag = 'internal scratch']
  %s0 = inlined_call_operand.hbm [shape: f32[16,32], index: 0, kind: input, shape index: {}]
  %s1 = inlined_call_operand.hbm [shape: f32[32,128], index: 1, kind: input, shape index: {}]
  %s2 = inlined_call_operand.vmem [shape: f32[1,128], index: 2, kind: input, shape index: {}]
  %s3 = inlined_call_operand.vmem [shape: f32[128,128], index: 3, kind: input, shape index: {}]
  %s4 = inlined_call_operand.vmem [shape: f32[1,128], index: 4, kind: input, shape index: {}]
  %s5 = inlined_call_operand.hbm [shape: f32[128,128], index: 5, kind: input, shape index: {}]
  %s6 = inlined_call_operand.vmem [shape: f32[1,128], index: 6, kind: input, shape index: {}]
  %s7 = inlined_call_operand.vmem [shape: f32[128,4], index: 7, kind: input, shape index: {}]
  %s8 = inlined_call_operand.vmem [shape: f32[1,4], index: 8, kind: input, shape index: {}]
  %s9 = inlined_call_operand.vmem [shape: f32[16,4], index: 9, kind: output, shape index: {}]
  %s10 = sld [smem:[#allocation0]]
  $region58: #{tpu_custom_call.1} parent=0
    _
  %s12 = ssub.s32 1, %s10
  %s13 = scalar_select 0, %s12, %s10
  $region1: #{tpu_custom_call.1} parent=0
    #allocation2 [shape = 'u8[8192]{0}', space=vmem, size = 0x2000, scoped, tag = 'input window, operand 0, single buffered']
    #allocation3 [shape = 's32[1]{0}', space=sflag, size = 0x4, scoped, tag = 'scoped memory for tpu_custom_call.1']
    #allocation4 [shape = 'u8[16384]{0}', space=vmem, size = 0x4000, scoped, tag = 'input window, operand 1, single buffered']
    #allocation5 [shape = 's32[1]{0}', space=sflag, size = 0x4, scoped, tag = 'scoped memory for tpu_custom_call.1']
    #allocation6 [shape = 'u8[65536]{0}', space=vmem, size = 0x10000, scoped, tag = 'input window, operand 5, single buffered']
    %14 = vsyncpa [#allocation3], 0
    %15 = vsyncpa [#allocation5], 0
    // Predicated region
    $region2: #{tpu_custom_call.1} parent=1 // pred_check
      _
    $region3: #{tpu_custom_call.1} parent=1 // pred_check_branch
      %17 = sbr.rel (0) target = $region5
    $region4: #{tpu_custom_call.1} parent=1 // pred_region
      %s19 = ssub.s32 256, 256
      %20 = vsyncadd [#allocation3], %s19
      %s21 = sshll.u32 [#allocation2], 4
      %s22 = int_to_ptr.vmem [resolvable:$true] %s21
      %27 = dma.hbm_to_vmem [thread:$0]  %s0, 256, %s22, [#allocation3], 128, 128, 8
    $region5: #{tpu_custom_call.1} parent=1 // pred_fallthru
      _
    // Predicated region
    $region6: #{tpu_custom_call.1} parent=1 // pred_check
      _
    $region7: #{tpu_custom_call.1} parent=1 // pred_check_branch
      %29 = sbr.rel (0) target = $region9
    $region8: #{tpu_custom_call.1} parent=1 // pred_region
      %s31 = ssub.s32 512, 512
      %32 = vsyncadd [#allocation5], %s31
      %s33 = sshll.u32 [#allocation4], 4
      %s34 = int_to_ptr.vmem [resolvable:$true] %s33
      %39 = dma.hbm_to_vmem [thread:$0]  %s1, 512, %s34, [#allocation5], 128, 128, 8
    $region9: #{tpu_custom_call.1} parent=1 // pred_fallthru
      _
    // Predicated region
    $region10: #{tpu_custom_call.1} parent=1 // pred_check
      _
    $region11: #{tpu_custom_call.1} parent=1 // pred_check_branch
      %41 = sbr.rel (0) target = $region13
    $region12: #{tpu_custom_call.1} parent=1 // pred_region
      _
    $region13: #{tpu_custom_call.1} parent=1 // pred_fallthru
      _
    // Predicated region
    $region14: #{tpu_custom_call.1} parent=1 // pred_check
      _
    $region15: #{tpu_custom_call.1} parent=1 // pred_check_branch
      %43 = sbr.rel (0) target = $region17
    $region16: #{tpu_custom_call.1} parent=1 // pred_region
      _
    $region17: #{tpu_custom_call.1} parent=1 // pred_fallthru
      _
    // Predicated region
    $region18: #{tpu_custom_call.1} parent=1 // pred_check
      _
    $region19: #{tpu_custom_call.1} parent=1 // pred_check_branch
      %45 = sbr.rel (0) target = $region21
    $region20: #{tpu_custom_call.1} parent=1 // pred_region
      _
    $region21: #{tpu_custom_call.1} parent=1 // pred_fallthru
      _
    // Predicated region
    $region22: #{tpu_custom_call.1} parent=1 // pred_check
      _
    $region23: #{tpu_custom_call.1} parent=1 // pred_check_branch
      %47 = sbr.rel (0) target = $region25
    $region24: #{tpu_custom_call.1} parent=1 // pred_region
      %s49 = ssub.s32 2048, 2048
      %50 = vsyncadd [#allocation5], %s49
      %s51 = sshll.u32 [#allocation6], 4
      %s52 = int_to_ptr.vmem [resolvable:$true] %s51
      %57 = dma.hbm_to_vmem [thread:$0]  %s5, 2048, %s52, [#allocation5], 128, 128, 8
    $region25: #{tpu_custom_call.1} parent=1 // pred_fallthru
      _
    // Predicated region
    $region26: #{tpu_custom_call.1} parent=1 // pred_check
      _
    $region27: #{tpu_custom_call.1} parent=1 // pred_check_branch
      %59 = sbr.rel (0) target = $region29
    $region28: #{tpu_custom_call.1} parent=1 // pred_region
      _
    $region29: #{tpu_custom_call.1} parent=1 // pred_fallthru
      _
    // Predicated region
    $region30: #{tpu_custom_call.1} parent=1 // pred_check
      _
    $region31: #{tpu_custom_call.1} parent=1 // pred_check_branch
      %61 = sbr.rel (0) target = $region33
    $region32: #{tpu_custom_call.1} parent=1 // pred_region
      _
    $region33: #{tpu_custom_call.1} parent=1 // pred_fallthru
      _
    // Predicated region
    $region34: #{tpu_custom_call.1} parent=1 // pred_check
      _
    $region35: #{tpu_custom_call.1} parent=1 // pred_check_branch
      %63 = sbr.rel (0) target = $region37
    $region36: #{tpu_custom_call.1} parent=1 // pred_region
      _
    $region37: #{tpu_custom_call.1} parent=1 // pred_fallthru
      _
    // Predicated region
    $region38: #{tpu_custom_call.1} parent=1 // pred_check
      _
    $region39: #{tpu_custom_call.1} parent=1 // pred_check_branch
      %65 = sbr.rel (0) target = $region41
    $region40: #{tpu_custom_call.1} parent=1 // pred_region
      %66 = dma.done [#allocation3], 256
    $region41: #{tpu_custom_call.1} parent=1 // pred_fallthru
      _
    // Predicated region
    $region42: #{tpu_custom_call.1} parent=1 // pred_check
      _
    $region43: #{tpu_custom_call.1} parent=1 // pred_check_branch
      %68 = sbr.rel (0) target = $region45
    $region44: #{tpu_custom_call.1} parent=1 // pred_region
      %69 = dma.done [#allocation5], 512
    $region45: #{tpu_custom_call.1} parent=1 // pred_fallthru
      _
    // Predicated region
    $region46: #{tpu_custom_call.1} parent=1 // pred_check
      _
    $region47: #{tpu_custom_call.1} parent=1 // pred_check_branch
      %71 = sbr.rel (0) target = $region49
    $region48: #{tpu_custom_call.1} parent=1 // pred_region
      %72 = dma.done [#allocation5], 2048
    $region49: #{tpu_custom_call.1} parent=1 // pred_fallthru
      _
    %v73 = vld [vmem:[%s2] sm:$0x1]
    %v74 = vld [vmem:[%s4] sm:$0x1]
    %v75 = vld [vmem:[%s6] sm:$0x1]
    %v76 = vld [vmem:[%s8] sm:$0x1]
    %v77 = vld [vmem:[#allocation2] sm:$0xff]
    %v78 = vld [vmem:[#allocation2 + $0x8] sm:$0xff]
    %v79 = vld [vmem:[#allocation4] sm:$0xff]
    %v80 = vld [vmem:[#allocation4 + $0x8] sm:$0xff]
    %v81 = vld [vmem:[#allocation4 + $0x10] sm:$0xff]
    %v82 = vld [vmem:[#allocation4 + $0x18] sm:$0xff]
    %v84 = vlaneseq
    %v85 = vshrl.u32 %v84, 7
    %v86 = vsub.s32 0, %v85
    %v87 = vrot.slane %v73, %v86
    %vm89 = vcmask 261120
    %v91 = vsel %vm89, %v77, 0
    %v94 = vsel %vm89, %v78, 0
    %96 = vmatprep.subr.mxu0 0.0
    %97 = vmatpush1.msra.mxu0 0.0
    %98 = vmatprep.subr.mxu0 0.0
    %99 = vmatpush1.msra.mxu0 0.0
    %100 = vmatprep.subr.mxu0 0.0
    %101 = vmatpush1.msra.mxu0 0.0
    %102 = vmatprep.subr.mxu0 0.0
    %103 = vmatpush1.msra.mxu0 0.0
    %104 = vmatprep.subr.mxu0 0.0
    %105 = vmatpush1.msra.mxu0 0.0
    %106 = vmatprep.subr.mxu0 0.0
    %107 = vmatpush1.msra.mxu0 0.0
    %108 = vmatprep.subr.mxu0 0.0
    %109 = vmatpush1.msra.mxu0 0.0
    %110 = vmatprep.subr.mxu0 0.0
    %111 = vmatpush1.msra.mxu0 0.0
    %112 = vmatprep.subr.mxu0 0.0
    %113 = vmatpush1.msra.mxu0 0.0
    %114 = vmatprep.subr.mxu0 0.0
    %115 = vmatpush1.msra.mxu0 0.0
    %116 = vmatprep.subr.mxu0 0.0
    %117 = vmatpush1.msra.mxu0 0.0
    %118 = vmatprep.subr.mxu0 0.0
    %119 = vmatpush1.msra.mxu0 0.0
    %120 = vmatprep.subr.mxu0 0.0
    %121 = vmatpush1.msra.mxu0 %v82
    %122 = vmatprep.subr.mxu0 0.0
    %123 = vmatpush1.msra.mxu0 %v81
    %124 = vmatprep.subr.mxu0 0.0
    %125 = vmatpush1.msra.mxu0 %v80
    %126 = vmatprep.subr.mxu0 0.0
    %127 = vmatpush1.msra.mxu0 %v79
    %128 = vmatprep.subr.mxu0 0.0
    %129 = vmatpush2.msra.mxu0 0.0
    %130 = vmatprep.subr.mxu0 0.0
    %131 = vmatpush2.msra.mxu0 0.0
    %132 = vmatprep.subr.mxu0 0.0
    %133 = vmatpush2.msra.mxu0 0.0
    %134 = vmatprep.subr.mxu0 0.0
    %135 = vmatpush2.msra.mxu0 0.0
    %136 = vmatprep.subr.mxu0 0.0
    %137 = vmatpush2.msra.mxu0 0.0
    %138 = vmatprep.subr.mxu0 0.0
    %139 = vmatpush2.msra.mxu0 0.0
    %140 = vmatprep.subr.mxu0 0.0
    %141 = vmatpush2.msra.mxu0 0.0
    %142 = vmatprep.subr.mxu0 0.0
    %143 = vmatpush2.msra.mxu0 0.0
    %144 = vmatprep.subr.mxu0 0.0
    %145 = vmatpush2.msra.mxu0 0.0
    %146 = vmatprep.subr.mxu0 0.0
    %147 = vmatpush2.msra.mxu0 0.0
    %148 = vmatprep.subr.mxu0 0.0
    %149 = vmatpush2.msra.mxu0 0.0
    %150 = vmatprep.subr.mxu0 0.0
    %151 = vmatpush2.msra.mxu0 0.0
    %152 = vmatprep.subr.mxu0 0.0
    %153 = vmatpush2.msra.mxu0 0.0
    %154 = vmatprep.subr.mxu0 0.0
    %155 = vmatpush2.msra.mxu0 0.0
    %156 = vmatprep.subr.mxu0 0.0
    %157 = vmatpush2.msra.mxu0 0.0
    %158 = vmatprep.subr.mxu0 0.0
    %159 = vmatpush2.msra.mxu0 0.0
    %160 = vmatprep.mubr.f32.mxu0 0.0
    %161 = vmatmul.mubr.f32.gmra.mxu0 %v91
    %v162 = vpop.f32.mrf.mxu0
    %v163 = vadd.f32 %v87, %v162
    %v164 = vpop.f32.mrf.mxu0
    %165 = vmatprep.mubr.f32.mxu0 0.0
    %166 = vmatmul.mubr.f32.gmra.mxu0 %v94
    %v167 = vpop.f32.mrf.mxu0
    %v168 = vadd.f32 %v87, %v167
    %v169 = vpop.f32.mrf.mxu0
    %170 = vdwg.mxu0
    %v171 = vmax.f32 %v163, 0.0
    %v172 = vmax.f32 %v168, 0.0
    %v173 = vld [vmem:[%s3] sm:$0xff]
    %v174 = vld [vmem:[%s3 + $0x8] sm:$0xff]
    %v175 = vld [vmem:[%s3 + $0x10] sm:$0xff]
    %v176 = vld [vmem:[%s3 + $0x18] sm:$0xff]
    %v177 = vld [vmem:[%s3 + $0x20] sm:$0xff]
    %v178 = vld [vmem:[%s3 + $0x28] sm:$0xff]
    %v179 = vld [vmem:[%s3 + $0x30] sm:$0xff]
    %v180 = vld [vmem:[%s3 + $0x38] sm:$0xff]
    %v181 = vld [vmem:[%s3 + $0x40] sm:$0xff]
    %v182 = vld [vmem:[%s3 + $0x48] sm:$0xff]
    %v183 = vld [vmem:[%s3 + $0x50] sm:$0xff]
    %v184 = vld [vmem:[%s3 + $0x58] sm:$0xff]
    %v185 = vld [vmem:[%s3 + $0x60] sm:$0xff]
    %v186 = vld [vmem:[%s3 + $0x68] sm:$0xff]
    %v187 = vld [vmem:[%s3 + $0x70] sm:$0xff]
    %v188 = vld [vmem:[%s3 + $0x78] sm:$0xff]
    %v190 = vlaneseq
    %v191 = vshrl.u32 %v190, 7
    %v192 = vsub.s32 0, %v191
    %v193 = vrot.slane %v74, %v192
    %195 = vmatprep.subr.mxu0 0.0
    %196 = vmatpush1.msra.mxu0 %v188
    %197 = vmatprep.subr.mxu0 0.0
    %198 = vmatpush1.msra.mxu0 %v187
    %199 = vmatprep.subr.mxu0 0.0
    %200 = vmatpush1.msra.mxu0 %v186
    %201 = vmatprep.subr.mxu0 0.0
    %202 = vmatpush1.msra.mxu0 %v185
    %203 = vmatprep.subr.mxu0 0.0
    %204 = vmatpush1.msra.mxu0 %v184
    %205 = vmatprep.subr.mxu0 0.0
    %206 = vmatpush1.msra.mxu0 %v183
    %207 = vmatprep.subr.mxu0 0.0
    %208 = vmatpush1.msra.mxu0 %v182
    %209 = vmatprep.subr.mxu0 0.0
    %210 = vmatpush1.msra.mxu0 %v181
    %211 = vmatprep.subr.mxu0 0.0
    %212 = vmatpush1.msra.mxu0 %v180
    %213 = vmatprep.subr.mxu0 0.0
    %214 = vmatpush1.msra.mxu0 %v179
    %215 = vmatprep.subr.mxu0 0.0
    %216 = vmatpush1.msra.mxu0 %v178
    %217 = vmatprep.subr.mxu0 0.0
    %218 = vmatpush1.msra.mxu0 %v177
    %219 = vmatprep.subr.mxu0 0.0
    %220 = vmatpush1.msra.mxu0 %v176
    %221 = vmatprep.subr.mxu0 0.0
    %222 = vmatpush1.msra.mxu0 %v175
    %223 = vmatprep.subr.mxu0 0.0
    %224 = vmatpush1.msra.mxu0 %v174
    %225 = vmatprep.subr.mxu0 0.0
    %226 = vmatpush1.msra.mxu0 %v173
    %227 = vmatprep.subr.mxu0 0.0
    %228 = vmatpush2.msra.mxu0 0.0
    %229 = vmatprep.subr.mxu0 0.0
    %230 = vmatpush2.msra.mxu0 0.0
    %231 = vmatprep.subr.mxu0 0.0
    %232 = vmatpush2.msra.mxu0 0.0
    %233 = vmatprep.subr.mxu0 0.0
    %234 = vmatpush2.msra.mxu0 0.0
    %235 = vmatprep.subr.mxu0 0.0
    %236 = vmatpush2.msra.mxu0 0.0
    %237 = vmatprep.subr.mxu0 0.0
    %238 = vmatpush2.msra.mxu0 0.0
    %239 = vmatprep.subr.mxu0 0.0
    %240 = vmatpush2.msra.mxu0 0.0
    %241 = vmatprep.subr.mxu0 0.0
    %242 = vmatpush2.msra.mxu0 0.0
    %243 = vmatprep.subr.mxu0 0.0
    %244 = vmatpush2.msra.mxu0 0.0
    %245 = vmatprep.subr.mxu0 0.0
    %246 = vmatpush2.msra.mxu0 0.0
    %247 = vmatprep.subr.mxu0 0.0
    %248 = vmatpush2.msra.mxu0 0.0
    %249 = vmatprep.subr.mxu0 0.0
    %250 = vmatpush2.msra.mxu0 0.0
    %251 = vmatprep.subr.mxu0 0.0
    %252 = vmatpush2.msra.mxu0 0.0
    %253 = vmatprep.subr.mxu0 0.0
    %254 = vmatpush2.msra.mxu0 0.0
    %255 = vmatprep.subr.mxu0 0.0
    %256 = vmatpush2.msra.mxu0 0.0
    %257 = vmatprep.subr.mxu0 0.0
    %258 = vmatpush2.msra.mxu0 0.0
    %259 = vmatprep.mubr.f32.mxu0 0.0
    %260 = vmatmul.mubr.f32.gmra.mxu0 %v171
    %v261 = vpop.f32.mrf.mxu0
    %v262 = vadd.f32 %v193, %v261
    %v263 = vpop.f32.mrf.mxu0
    %264 = vmatprep.mubr.f32.mxu0 0.0
    %265 = vmatmul.mubr.f32.gmra.mxu0 %v172
    %v266 = vpop.f32.mrf.mxu0
    %v267 = vadd.f32 %v193, %v266
    %v268 = vpop.f32.mrf.mxu0
    %269 = vdwg.mxu0
    %v270 = vmax.f32 %v262, 0.0
    %v271 = vmax.f32 %v267, 0.0
    %v272 = vld [vmem:[#allocation6] sm:$0xff]
    %v273 = vld [vmem:[#allocation6 + $0x8] sm:$0xff]
    %v274 = vld [vmem:[#allocation6 + $0x10] sm:$0xff]
    %v275 = vld [vmem:[#allocation6 + $0x18] sm:$0xff]
    %v276 = vld [vmem:[#allocation6 + $0x20] sm:$0xff]
    %v277 = vld [vmem:[#allocation6 + $0x28] sm:$0xff]
    %v278 = vld [vmem:[#allocation6 + $0x30] sm:$0xff]
    %v279 = vld [vmem:[#allocation6 + $0x38] sm:$0xff]
    %v280 = vld [vmem:[#allocation6 + $0x40] sm:$0xff]
    %v281 = vld [vmem:[#allocation6 + $0x48] sm:$0xff]
    %v282 = vld [vmem:[#allocation6 + $0x50] sm:$0xff]
    %v283 = vld [vmem:[#allocation6 + $0x58] sm:$0xff]
    %v284 = vld [vmem:[#allocation6 + $0x60] sm:$0xff]
    %v285 = vld [vmem:[#allocation6 + $0x68] sm:$0xff]
    %v286 = vld [vmem:[#allocation6 + $0x70] sm:$0xff]
    %v287 = vld [vmem:[#allocation6 + $0x78] sm:$0xff]
    %v289 = vlaneseq
    %v290 = vshrl.u32 %v289, 7
    %v291 = vsub.s32 0, %v290
    %v292 = vrot.slane %v75, %v291
    %294 = vmatprep.subr.mxu0 0.0
    %295 = vmatpush1.msra.mxu0 %v287
    %296 = vmatprep.subr.mxu0 0.0
    %297 = vmatpush1.msra.mxu0 %v286
    %298 = vmatprep.subr.mxu0 0.0
    %299 = vmatpush1.msra.mxu0 %v285
    %300 = vmatprep.subr.mxu0 0.0
    %301 = vmatpush1.msra.mxu0 %v284
    %302 = vmatprep.subr.mxu0 0.0
    %303 = vmatpush1.msra.mxu0 %v283
    %304 = vmatprep.subr.mxu0 0.0
    %305 = vmatpush1.msra.mxu0 %v282
    %306 = vmatprep.subr.mxu0 0.0
    %307 = vmatpush1.msra.mxu0 %v281
    %308 = vmatprep.subr.mxu0 0.0
    %309 = vmatpush1.msra.mxu0 %v280
    %310 = vmatprep.subr.mxu0 0.0
    %311 = vmatpush1.msra.mxu0 %v279
    %312 = vmatprep.subr.mxu0 0.0
    %313 = vmatpush1.msra.mxu0 %v278
    %314 = vmatprep.subr.mxu0 0.0
    %315 = vmatpush1.msra.mxu0 %v277
    %316 = vmatprep.subr.mxu0 0.0
    %317 = vmatpush1.msra.mxu0 %v276
    %318 = vmatprep.subr.mxu0 0.0
    %319 = vmatpush1.msra.mxu0 %v275
    %320 = vmatprep.subr.mxu0 0.0
    %321 = vmatpush1.msra.mxu0 %v274
    %322 = vmatprep.subr.mxu0 0.0
    %323 = vmatpush1.msra.mxu0 %v273
    %324 = vmatprep.subr.mxu0 0.0
    %325 = vmatpush1.msra.mxu0 %v272
    %326 = vmatprep.subr.mxu0 0.0
    %327 = vmatpush2.msra.mxu0 0.0
    %328 = vmatprep.subr.mxu0 0.0
    %329 = vmatpush2.msra.mxu0 0.0
    %330 = vmatprep.subr.mxu0 0.0
    %331 = vmatpush2.msra.mxu0 0.0
    %332 = vmatprep.subr.mxu0 0.0
    %333 = vmatpush2.msra.mxu0 0.0
    %334 = vmatprep.subr.mxu0 0.0
    %335 = vmatpush2.msra.mxu0 0.0
    %336 = vmatprep.subr.mxu0 0.0
    %337 = vmatpush2.msra.mxu0 0.0
    %338 = vmatprep.subr.mxu0 0.0
    %339 = vmatpush2.msra.mxu0 0.0
    %340 = vmatprep.subr.mxu0 0.0
    %341 = vmatpush2.msra.mxu0 0.0
    %342 = vmatprep.subr.mxu0 0.0
    %343 = vmatpush2.msra.mxu0 0.0
    %344 = vmatprep.subr.mxu0 0.0
    %345 = vmatpush2.msra.mxu0 0.0
    %346 = vmatprep.subr.mxu0 0.0
    %347 = vmatpush2.msra.mxu0 0.0
    %348 = vmatprep.subr.mxu0 0.0
    %349 = vmatpush2.msra.mxu0 0.0
    %350 = vmatprep.subr.mxu0 0.0
    %351 = vmatpush2.msra.mxu0 0.0
    %352 = vmatprep.subr.mxu0 0.0
    %353 = vmatpush2.msra.mxu0 0.0
    %354 = vmatprep.subr.mxu0 0.0
    %355 = vmatpush2.msra.mxu0 0.0
    %356 = vmatprep.subr.mxu0 0.0
    %357 = vmatpush2.msra.mxu0 0.0
    %358 = vmatprep.mubr.f32.mxu0 0.0
    %359 = vmatmul.mubr.f32.gmra.mxu0 %v270
    %v360 = vpop.f32.mrf.mxu0
    %v361 = vadd.f32 %v292, %v360
    %v362 = vpop.f32.mrf.mxu0
    %363 = vmatprep.mubr.f32.mxu0 0.0
    %364 = vmatmul.mubr.f32.gmra.mxu0 %v271
    %v365 = vpop.f32.mrf.mxu0
    %v366 = vadd.f32 %v292, %v365
    %v367 = vpop.f32.mrf.mxu0
    %368 = vdwg.mxu0
    %v369 = vmax.f32 %v361, 0.0
    %v370 = vmax.f32 %v366, 0.0
    %v371 = vld [vmem:[%s7] sm:$0xff]
    %v372 = vld [vmem:[%s7 + $0x8] sm:$0xff]
    %v373 = vld [vmem:[%s7 + $0x10] sm:$0xff]
    %v374 = vld [vmem:[%s7 + $0x18] sm:$0xff]
    %v375 = vld [vmem:[%s7 + $0x20] sm:$0xff]
    %v376 = vld [vmem:[%s7 + $0x28] sm:$0xff]
    %v377 = vld [vmem:[%s7 + $0x30] sm:$0xff]
    %v378 = vld [vmem:[%s7 + $0x38] sm:$0xff]
    %v379 = vld [vmem:[%s7 + $0x40] sm:$0xff]
    %v380 = vld [vmem:[%s7 + $0x48] sm:$0xff]
    %v381 = vld [vmem:[%s7 + $0x50] sm:$0xff]
    %v382 = vld [vmem:[%s7 + $0x58] sm:$0xff]
    %v383 = vld [vmem:[%s7 + $0x60] sm:$0xff]
    %v384 = vld [vmem:[%s7 + $0x68] sm:$0xff]
    %v385 = vld [vmem:[%s7 + $0x70] sm:$0xff]
    %v386 = vld [vmem:[%s7 + $0x78] sm:$0xff]
    %v388 = vlaneseq
    %v389 = vshrl.u32 %v388, 7
    %v390 = vsub.s32 0, %v389
    %v391 = vrot.slane %v76, %v390
    %393 = vmatprep.subr.mxu0 0.0
    %394 = vmatpush1.msra.mxu0 %v386
    %395 = vmatprep.subr.mxu0 0.0
    %396 = vmatpush1.msra.mxu0 %v385
    %397 = vmatprep.subr.mxu0 0.0
    %398 = vmatpush1.msra.mxu0 %v384
    %399 = vmatprep.subr.mxu0 0.0
    %400 = vmatpush1.msra.mxu0 %v383
    %401 = vmatprep.subr.mxu0 0.0
    %402 = vmatpush1.msra.mxu0 %v382
    %403 = vmatprep.subr.mxu0 0.0
    %404 = vmatpush1.msra.mxu0 %v381
    %405 = vmatprep.subr.mxu0 0.0
    %406 = vmatpush1.msra.mxu0 %v380
    %407 = vmatprep.subr.mxu0 0.0
    %408 = vmatpush1.msra.mxu0 %v379
    %409 = vmatprep.subr.mxu0 0.0
    %410 = vmatpush1.msra.mxu0 %v378
    %411 = vmatprep.subr.mxu0 0.0
    %412 = vmatpush1.msra.mxu0 %v377
    %413 = vmatprep.subr.mxu0 0.0
    %414 = vmatpush1.msra.mxu0 %v376
    %415 = vmatprep.subr.mxu0 0.0
    %416 = vmatpush1.msra.mxu0 %v375
    %417 = vmatprep.subr.mxu0 0.0
    %418 = vmatpush1.msra.mxu0 %v374
    %419 = vmatprep.subr.mxu0 0.0
    %420 = vmatpush1.msra.mxu0 %v373
    %421 = vmatprep.subr.mxu0 0.0
    %422 = vmatpush1.msra.mxu0 %v372
    %423 = vmatprep.subr.mxu0 0.0
    %424 = vmatpush1.msra.mxu0 %v371
    %425 = vmatprep.subr.mxu0 0.0
    %426 = vmatpush2.msra.mxu0 0.0
    %427 = vmatprep.subr.mxu0 0.0
    %428 = vmatpush2.msra.mxu0 0.0
    %429 = vmatprep.subr.mxu0 0.0
    %430 = vmatpush2.msra.mxu0 0.0
    %431 = vmatprep.subr.mxu0 0.0
    %432 = vmatpush2.msra.mxu0 0.0
    %433 = vmatprep.subr.mxu0 0.0
    %434 = vmatpush2.msra.mxu0 0.0
    %435 = vmatprep.subr.mxu0 0.0
    %436 = vmatpush2.msra.mxu0 0.0
    %437 = vmatprep.subr.mxu0 0.0
    %438 = vmatpush2.msra.mxu0 0.0
    %439 = vmatprep.subr.mxu0 0.0
    %440 = vmatpush2.msra.mxu0 0.0
    %441 = vmatprep.subr.mxu0 0.0
    %442 = vmatpush2.msra.mxu0 0.0
    %443 = vmatprep.subr.mxu0 0.0
    %444 = vmatpush2.msra.mxu0 0.0
    %445 = vmatprep.subr.mxu0 0.0
    %446 = vmatpush2.msra.mxu0 0.0
    %447 = vmatprep.subr.mxu0 0.0
    %448 = vmatpush2.msra.mxu0 0.0
    %449 = vmatprep.subr.mxu0 0.0
    %450 = vmatpush2.msra.mxu0 0.0
    %451 = vmatprep.subr.mxu0 0.0
    %452 = vmatpush2.msra.mxu0 0.0
    %453 = vmatprep.subr.mxu0 0.0
    %454 = vmatpush2.msra.mxu0 0.0
    %455 = vmatprep.subr.mxu0 0.0
    %456 = vmatpush2.msra.mxu0 0.0
    %457 = vmatprep.mubr.f32.mxu0 0.0
    %458 = vmatmul.mubr.f32.gmra.mxu0 %v369
    %v459 = vpop.f32.mrf.mxu0
    %v460 = vadd.f32 %v391, %v459
    %v461 = vpop.f32.mrf.mxu0
    %462 = vmatprep.mubr.f32.mxu0 0.0
    %463 = vmatmul.mubr.f32.gmra.mxu0 %v370
    %v464 = vpop.f32.mrf.mxu0
    %v465 = vadd.f32 %v391, %v464
    %v466 = vpop.f32.mrf.mxu0
    %467 = vdwg.mxu0
    %v468 = vmul.f32 %v460, %v460
    %v469 = vmul.f32 %v465, %v465
    %vm470 = vcmask 31744
    %v471 = vsel %vm470, %v468, 0.0
    %472 = vadd.xlane.f32.xlu0 %v471
    %v473 = vpop.xlane.xlu0 %472
    %v474 = vsel %vm470, %v469, 0.0
    %475 = vadd.xlane.f32.xlu0 %v474
    %v476 = vpop.xlane.xlu0 %475
    %v477 = vrsqrt.pop %v473
    %v478 = vmul.f32 %v473, %v477
    %vm479 = vcmp.eq.f32.partialorder %v473, inf
    %v480 = vsel %vm479, %v473, %v478
    %vm481 = vcmp.eq.f32.partialorder %v473, 0.0
    %v482 = vand.u32 %v473, 2147483648
    %v483 = vsel %vm481, %v482, %v480
    %v484 = vrsqrt.pop %v476
    %v485 = vmul.f32 %v476, %v484
    %vm486 = vcmp.eq.f32.partialorder %v476, inf
    %v487 = vsel %vm486, %v476, %v485
    %vm488 = vcmp.eq.f32.partialorder %v476, 0.0
    %v489 = vand.u32 %v476, 2147483648
    %v490 = vsel %vm488, %v489, %v487
    %v491 = vadd.f32 %v483, 1e-08
    %v492 = vadd.f32 %v490, 1e-08
    %v493 = vrcp.pop %v491
    %v494 = vrcp.pop %v492
    %v495 = vmul.f32 %v460, %v493
    %v496 = vmul.f32 %v465, %v494
    %497 = vst.msk [vmem:[%s9] sm:$0xff] %vm470, %v495
    %498 = vst.msk [vmem:[%s9 + $0x8] sm:$0xff] %vm470, %v496
    // Predicated region
    $region50: #{tpu_custom_call.1} parent=1 // pred_check
      _
    $region51: #{tpu_custom_call.1} parent=1 // pred_check_branch
      %500 = sbr.rel (0) target = $region53
    $region52: #{tpu_custom_call.1} parent=1 // pred_region
      _
    $region53: #{tpu_custom_call.1} parent=1 // pred_fallthru
      _
    // Predicated region
    $region54: #{tpu_custom_call.1} parent=1 // pred_check
      _
    $region55: #{tpu_custom_call.1} parent=1 // pred_check_branch
      %502 = sbr.rel (0) target = $region57
    $region56: #{tpu_custom_call.1} parent=1 // pred_region
      _
    $region57: #{tpu_custom_call.1} parent=1 // pred_fallthru
      _
    %503 = vsyncpa [#allocation3], 1
    %504 = vsyncpa [#allocation5], 1

</llo_original>
